<compile_context>
chip_gen: v5e
topology: v5e:2x2
jax: 0.10.0
libtpu: 0.0.40
codegen_flags: <defaults>
</compile_context>

<pallas_src>
import functools

import jax
import jax.numpy as jnp
from jax.experimental import pallas as pl
from jax.experimental.pallas import tpu as pltpu


def _spectral_kernel_mxu(x_ref, w_ref, o_ref):
    """Batched per-mode matmul on the MXU (used when channel counts are large).

    x_ref: (Lt, B, 2C)   w_ref: (Lt, 2C, 2O)   o_ref: (Lt, B, 2O)
    """
    o_ref[...] = jnp.einsum(
        "lbc,lco->lbo", x_ref[...], w_ref[...],
        preferred_element_type=jnp.float32,
    ).astype(o_ref.dtype)


def _spectral_kernel_vpu(x_ref, w_ref, o_ref):
    """FMA accumulation over the packed input-channel axis on the VPU.

    Exact f32; keeps live state to one (Lt, B, 2O) accumulator instead of
    materializing (C, O, L) broadcast temporaries. Preferred for small C / O.
    """
    x = x_ref[...]                        # (Lt, B, 2C)
    w = w_ref[...]                        # (Lt, 2C, 2O)
    two_c = x.shape[-1]
    acc = jnp.zeros(o_ref.shape, jnp.float32)
    for c in range(two_c):                # static, small unroll
        acc = acc + x[:, :, c:c + 1] * w[:, c:c + 1, :]
    o_ref[...] = acc


def _spectral_mix(x_packed, w_packed):
    """Per-mode complex channel mixing, packed as real arithmetic.

    x_packed : (L, B, 2C) f32   spectrum, [Re | Im] stacked on channels
    w_packed : (L, 2C, 2O) f32  per-mode block matrix [[wr, wi], [-wi, wr]]
    returns  : (L, B, 2O) f32   output spectrum, [Re | Im] stacked on channels
    """
    L, B, two_c = x_packed.shape
    _, _, two_o = w_packed.shape

    # Mode-tile size: bound the per-step blocks (~2 MiB total) so double
    # buffering fits comfortably inside the scoped-VMEM default on every chip
    # (incl. v7x: 32 MiB scoped / 64 MiB physical), while still producing
    # many grid steps to pipeline over at production mode counts.
    bytes_per_mode = 4 * (two_c * two_o + B * two_c + B * two_o)
    lt = max(1, min(L, 128, (2 * 1024 * 1024) // bytes_per_mode))
    num_tiles = pl.cdiv(L, lt)
    l_pad = num_tiles * lt
    if l_pad != L:
        pad = l_pad - L
        x_packed = jnp.pad(x_packed, ((0, pad), (0, 0), (0, 0)))
        w_packed = jnp.pad(w_packed, ((0, pad), (0, 0), (0, 0)))

    # MXU only pays once the per-mode matmul is big enough to fill it;
    # otherwise stay on the VPU with exact-f32 FMAs (toy config takes this path).
    use_mxu = (two_c >= 64) and (two_o >= 64)
    kernel = _spectral_kernel_mxu if use_mxu else _spectral_kernel_vpu

    cost = pl.CostEstimate(
        flops=2 * l_pad * B * two_c * two_o,
        transcendentals=0,
        bytes_accessed=4 * l_pad * (B * two_c + two_c * two_o + B * two_o),
    )

    out = pl.pallas_call(
        kernel,
        out_shape=jax.ShapeDtypeStruct((l_pad, B, two_o), jnp.float32),
        grid_spec=pltpu.PrefetchScalarGridSpec(
            num_scalar_prefetch=0,
            grid=(num_tiles,),
            in_specs=[
                pl.BlockSpec((lt, B, two_c), lambda m: (m, 0, 0)),
                pl.BlockSpec((lt, two_c, two_o), lambda m: (m, 0, 0)),
            ],
            out_specs=pl.BlockSpec((lt, B, two_o), lambda m: (m, 0, 0)),
        ),
        compiler_params=pltpu.CompilerParams(
            dimension_semantics=("parallel",)),
        cost_estimate=cost,
    )(x_packed, w_packed)
    return out[:L]


def _pack_spectral_weight(w_real, w_imag, L):
    """(C, O, n_modes) real/imag -> (L, 2C, 2O) real block matrix per mode.

    Static parameter prep: in a real model this is hoisted out of the forward
    path / constant-folded under jit (done once, not per step).
    """
    wr = jnp.transpose(w_real[:, :, :L], (2, 0, 1)).astype(jnp.float32)  # (L, C, O)
    wi = jnp.transpose(w_imag[:, :, :L], (2, 0, 1)).astype(jnp.float32)  # (L, C, O)
    top = jnp.concatenate([wr, wi], axis=-1)       # (L, C, 2O)
    bot = jnp.concatenate([-wi, wr], axis=-1)      # (L, C, 2O)
    return jnp.concatenate([top, bot], axis=-2)    # (L, 2C, 2O)


@functools.partial(jax.jit, static_argnums=(3,))
def spectral_conv1d(x, w_real, w_imag, n_modes):
    """Forward pass of SpectralConv1d.

    x       : (B, C_in, T)
    w_real  : (C_in, C_out, n_modes) f32  (real part of the complex weight)
    w_imag  : (C_in, C_out, n_modes) f32  (imag part of the complex weight)
    returns : (B, C_out, T), dtype of x
    """
    B, C, T = x.shape
    O = w_real.shape[1]

    x_ft = jnp.fft.rfft(x.astype(jnp.float32), axis=-1)   # (B, C, L_full) c64
    L_full = T // 2 + 1
    L = min(n_modes, L_full)

    # Pack spectrum: (L, B, 2C), real|imag stacked densely on the lane axis.
    xm = x_ft[:, :, :L]
    x_packed = jnp.concatenate(
        [jnp.real(xm), jnp.imag(xm)], axis=1).astype(jnp.float32)   # (B, 2C, L)
    x_packed = jnp.transpose(x_packed, (2, 0, 1))                   # (L, B, 2C)

    w_packed = _pack_spectral_weight(w_real, w_imag, L)             # (L, 2C, 2O)

    out_packed = _spectral_mix(x_packed, w_packed)                  # (L, B, 2O)

    out_ft = out_packed[:, :, :O] + 1j * out_packed[:, :, O:]       # (L, B, O) c64
    out_ft = jnp.transpose(out_ft, (1, 2, 0)).astype(jnp.complex64)  # (B, O, L)
    # Modes >= L are zero, matching torch.zeros(out_ft); pad explicitly.
    if L < L_full:
        out_ft = jnp.pad(out_ft, ((0, 0), (0, 0), (0, L_full - L)))
    y = jnp.fft.irfft(out_ft, n=T, axis=-1)
    return y.astype(x.dtype)


def _reference(x, w_real, w_imag, n_modes):
    """Pure-JAX reference mirroring the PyTorch module exactly."""
    B, C, T = x.shape
    O = w_real.shape[1]
    x_ft = jnp.fft.rfft(x, axis=-1)
    L_full = x_ft.shape[-1]
    L = min(n_modes, L_full)
    w = (w_real + 1j * w_imag).astype(x_ft.dtype)
    out_ft = jnp.zeros((B, O, L_full), dtype=x_ft.dtype)
    mixed = jnp.einsum('bci,coi->boi', x_ft[:, :, :L], w[:, :, :L])
    out_ft = out_ft.at[:, :, :L].set(mixed)
    return jnp.fft.irfft(out_ft, n=T, axis=-1)


if __name__ == "__main__":
    # Module config: in_channels=4, out_channels=4, n_modes=8; input (B=2, C=4, T=16)
    in_channels, out_channels, n_modes = 4, 4, 8
    B, T = 2, 16

    key = jax.random.PRNGKey(0)
    kx, kwr, kwi = jax.random.split(key, 3)

    scale = 1.0 / (in_channels * out_channels)
    # torch.randn(..., dtype=cfloat) -> independent N(0,1) real & imag parts.
    w_real = scale * jax.random.normal(kwr, (in_channels, out_channels, n_modes), jnp.float32)
    w_imag = scale * jax.random.normal(kwi, (in_channels, out_channels, n_modes), jnp.float32)

    x = jax.random.normal(kx, (B, in_channels, T), jnp.float32)

    y = spectral_conv1d(x, w_real, w_imag, n_modes)
    y = jax.block_until_ready(y)

    y_ref = _reference(x, w_real, w_imag, n_modes)
    assert y.shape == (B, out_channels, T)
    assert jnp.allclose(y, y_ref, atol=1e-5, rtol=1e-5), "mismatch vs reference"

    print("KERNEL_OK")
</pallas_src>

<mosaic_0001>
module attributes {stable_mosaic.version = 11 : i64} {
  func.func @_spectral_kernel_vpu(%arg0: i32, %arg1: memref<8x2x8xf32, #tpu.memory_space<vmem>>, %arg2: memref<8x8x8xf32, #tpu.memory_space<vmem>>, %arg3: memref<8x2x8xf32, #tpu.memory_space<vmem>>) attributes {dimension_semantics = [#tpu.dimension_semantics<parallel>], iteration_bounds = array<i64: 1>, scalar_prefetch = 0 : i64, scratch_operands = 0 : i64, tpu.core_type = #tpu.core_type<tc>, window_params = [{transform_indices = @transform_0, window_bounds = array<i64: 8, 2, 8>}, {transform_indices = @transform_1, window_bounds = array<i64: 8, 8, 8>}, {transform_indices = @transform_2, window_bounds = array<i64: 8, 2, 8>}]} {
    %c0 = arith.constant 0 : index
    %c0_0 = arith.constant 0 : index
    %c0_1 = arith.constant 0 : index
    %0 = vector.load %arg1[%c0, %c0_0, %c0_1] : memref<8x2x8xf32, #tpu.memory_space<vmem>>, vector<8x2x8xf32>
    %c0_2 = arith.constant 0 : index
    %c0_3 = arith.constant 0 : index
    %c0_4 = arith.constant 0 : index
    %1 = vector.load %arg2[%c0_2, %c0_3, %c0_4] : memref<8x8x8xf32, #tpu.memory_space<vmem>>, vector<8x8x8xf32>
    %cst = arith.constant 0.000000e+00 : f32
    %2 = vector.broadcast %cst : f32 to vector<8x2x8xf32>
    %3 = vector.extract_strided_slice %0 {offsets = [0, 0, 0], sizes = [8, 2, 1], strides = [1, 1, 1]} : vector<8x2x8xf32> to vector<8x2x1xf32>
    %4 = vector.extract_strided_slice %1 {offsets = [0, 0, 0], sizes = [8, 1, 8], strides = [1, 1, 1]} : vector<8x8x8xf32> to vector<8x1x8xf32>
    %5 = vector.broadcast %3 : vector<8x2x1xf32> to vector<8x2x8xf32>
    %6 = vector.broadcast %4 : vector<8x1x8xf32> to vector<8x2x8xf32>
    %7 = arith.mulf %5, %6 : vector<8x2x8xf32>
    %8 = arith.addf %2, %7 : vector<8x2x8xf32>
    %9 = vector.extract_strided_slice %0 {offsets = [0, 0, 1], sizes = [8, 2, 1], strides = [1, 1, 1]} : vector<8x2x8xf32> to vector<8x2x1xf32>
    %10 = vector.extract_strided_slice %1 {offsets = [0, 1, 0], sizes = [8, 1, 8], strides = [1, 1, 1]} : vector<8x8x8xf32> to vector<8x1x8xf32>
    %11 = vector.broadcast %9 : vector<8x2x1xf32> to vector<8x2x8xf32>
    %12 = vector.broadcast %10 : vector<8x1x8xf32> to vector<8x2x8xf32>
    %13 = arith.mulf %11, %12 : vector<8x2x8xf32>
    %14 = arith.addf %8, %13 : vector<8x2x8xf32>
    %15 = vector.extract_strided_slice %0 {offsets = [0, 0, 2], sizes = [8, 2, 1], strides = [1, 1, 1]} : vector<8x2x8xf32> to vector<8x2x1xf32>
    %16 = vector.extract_strided_slice %1 {offsets = [0, 2, 0], sizes = [8, 1, 8], strides = [1, 1, 1]} : vector<8x8x8xf32> to vector<8x1x8xf32>
    %17 = vector.broadcast %15 : vector<8x2x1xf32> to vector<8x2x8xf32>
    %18 = vector.broadcast %16 : vector<8x1x8xf32> to vector<8x2x8xf32>
    %19 = arith.mulf %17, %18 : vector<8x2x8xf32>
    %20 = arith.addf %14, %19 : vector<8x2x8xf32>
    %21 = vector.extract_strided_slice %0 {offsets = [0, 0, 3], sizes = [8, 2, 1], strides = [1, 1, 1]} : vector<8x2x8xf32> to vector<8x2x1xf32>
    %22 = vector.extract_strided_slice %1 {offsets = [0, 3, 0], sizes = [8, 1, 8], strides = [1, 1, 1]} : vector<8x8x8xf32> to vector<8x1x8xf32>
    %23 = vector.broadcast %21 : vector<8x2x1xf32> to vector<8x2x8xf32>
    %24 = vector.broadcast %22 : vector<8x1x8xf32> to vector<8x2x8xf32>
    %25 = arith.mulf %23, %24 : vector<8x2x8xf32>
    %26 = arith.addf %20, %25 : vector<8x2x8xf32>
    %27 = vector.extract_strided_slice %0 {offsets = [0, 0, 4], sizes = [8, 2, 1], strides = [1, 1, 1]} : vector<8x2x8xf32> to vector<8x2x1xf32>
    %28 = vector.extract_strided_slice %1 {offsets = [0, 4, 0], sizes = [8, 1, 8], strides = [1, 1, 1]} : vector<8x8x8xf32> to vector<8x1x8xf32>
    %29 = vector.broadcast %27 : vector<8x2x1xf32> to vector<8x2x8xf32>
    %30 = vector.broadcast %28 : vector<8x1x8xf32> to vector<8x2x8xf32>
    %31 = arith.mulf %29, %30 : vector<8x2x8xf32>
    %32 = arith.addf %26, %31 : vector<8x2x8xf32>
    %33 = vector.extract_strided_slice %0 {offsets = [0, 0, 5], sizes = [8, 2, 1], strides = [1, 1, 1]} : vector<8x2x8xf32> to vector<8x2x1xf32>
    %34 = vector.extract_strided_slice %1 {offsets = [0, 5, 0], sizes = [8, 1, 8], strides = [1, 1, 1]} : vector<8x8x8xf32> to vector<8x1x8xf32>
    %35 = vector.broadcast %33 : vector<8x2x1xf32> to vector<8x2x8xf32>
    %36 = vector.broadcast %34 : vector<8x1x8xf32> to vector<8x2x8xf32>
    %37 = arith.mulf %35, %36 : vector<8x2x8xf32>
    %38 = arith.addf %32, %37 : vector<8x2x8xf32>
    %39 = vector.extract_strided_slice %0 {offsets = [0, 0, 6], sizes = [8, 2, 1], strides = [1, 1, 1]} : vector<8x2x8xf32> to vector<8x2x1xf32>
    %40 = vector.extract_strided_slice %1 {offsets = [0, 6, 0], sizes = [8, 1, 8], strides = [1, 1, 1]} : vector<8x8x8xf32> to vector<8x1x8xf32>
    %41 = vector.broadcast %39 : vector<8x2x1xf32> to vector<8x2x8xf32>
    %42 = vector.broadcast %40 : vector<8x1x8xf32> to vector<8x2x8xf32>
    %43 = arith.mulf %41, %42 : vector<8x2x8xf32>
    %44 = arith.addf %38, %43 : vector<8x2x8xf32>
    %45 = vector.extract_strided_slice %0 {offsets = [0, 0, 7], sizes = [8, 2, 1], strides = [1, 1, 1]} : vector<8x2x8xf32> to vector<8x2x1xf32>
    %46 = vector.extract_strided_slice %1 {offsets = [0, 7, 0], sizes = [8, 1, 8], strides = [1, 1, 1]} : vector<8x8x8xf32> to vector<8x1x8xf32>
    %47 = vector.broadcast %45 : vector<8x2x1xf32> to vector<8x2x8xf32>
    %48 = vector.broadcast %46 : vector<8x1x8xf32> to vector<8x2x8xf32>
    %49 = arith.mulf %47, %48 : vector<8x2x8xf32>
    %50 = arith.addf %44, %49 : vector<8x2x8xf32>
    %c0_5 = arith.constant 0 : index
    %c0_6 = arith.constant 0 : index
    %c0_7 = arith.constant 0 : index
    %51 = vector.load %arg3[%c0_5, %c0_6, %c0_7] : memref<8x2x8xf32, #tpu.memory_space<vmem>>, vector<8x2x8xf32>
    tpu.vector_store %arg3[%c0_5, %c0_6, %c0_7], %50 {strides = array<i32>} : memref<8x2x8xf32, #tpu.memory_space<vmem>>, vector<8x2x8xf32>,
    return
  }
  func.func @transform_0(%arg0: i32) -> (i32, i32, i32) {
    %c0_i32 = arith.constant 0 : i32
    %c0_i32_0 = arith.constant 0 : i32
    %c0_i32_1 = arith.constant 0 : i32
    return %arg0, %c0_i32, %c0_i32_0 : i32, i32, i32
  }
  func.func @transform_1(%arg0: i32) -> (i32, i32, i32) {
    %c0_i32 = arith.constant 0 : i32
    %c0_i32_0 = arith.constant 0 : i32
    %c0_i32_1 = arith.constant 0 : i32
    return %arg0, %c0_i32, %c0_i32_0 : i32, i32, i32
  }
  func.func @transform_2(%arg0: i32) -> (i32, i32, i32) {
    %c0_i32 = arith.constant 0 : i32
    %c0_i32_0 = arith.constant 0 : i32
    %c0_i32_1 = arith.constant 0 : i32
    return %arg0, %c0_i32, %c0_i32_0 : i32, i32, i32
  }
}

</mosaic_0001>

<llo_original>
// kernel: reverse.1
$region0: #{reverse.1}
  #allocation0 [shape = 's32[1]{0}', space=sflag, size = 0x4, scoped, tag = 'scoped memory for reverse.1']
  %s0 = inlined_call_operand.vmem [shape: f32[2,4,7], index: 0, kind: input, shape index: {}]
  %s1 = inlined_call_operand.vmem [shape: f32[2,4,7], index: 1, kind: output, shape index: {}]
  %s2 = scalar_lea.vmem %s0, 12
  %v3 = vld [vmem:[%s2] sm:$0x3]
  %4 = vst [vmem:[%s1] sm:$0x3] %v3
  %s5 = scalar_lea.vmem %s0, 10
  %v6 = vld [vmem:[%s5] sm:$0x3]
  %s7 = scalar_lea.vmem %s1, 2
  %8 = vst [vmem:[%s7] sm:$0x3] %v6
  %s9 = scalar_lea.vmem %s0, 8
  %v10 = vld [vmem:[%s9] sm:$0x3]
  %s11 = scalar_lea.vmem %s1, 4
  %12 = vst [vmem:[%s11] sm:$0x3] %v10
  %s13 = scalar_lea.vmem %s0, 6
  %v14 = vld [vmem:[%s13] sm:$0x3]
  %s15 = scalar_lea.vmem %s1, 6
  %16 = vst [vmem:[%s15] sm:$0x3] %v14
  %s17 = scalar_lea.vmem %s0, 4
  %v18 = vld [vmem:[%s17] sm:$0x3]
  %s19 = scalar_lea.vmem %s1, 8
  %20 = vst [vmem:[%s19] sm:$0x3] %v18
  %s21 = scalar_lea.vmem %s0, 2
  %v22 = vld [vmem:[%s21] sm:$0x3]
  %s23 = scalar_lea.vmem %s1, 10
  %24 = vst [vmem:[%s23] sm:$0x3] %v22
  %v25 = vld [vmem:[%s0] sm:$0x3]
  %s26 = scalar_lea.vmem %s1, 12
  %27 = vst [vmem:[%s26] sm:$0x3] %v25

// kernel: spectral_conv1d.1
$region0: #{spectral_conv1d.1}
  #allocation0 [shape = 'u32[]', space=smem, size = 0x4, offset = 0x4, fixed_abs, tag = 'smem constant byte address 0x4 - core index']
  #allocation1 [shape = 'u32[72,128]{1,0:T(1,128)}', space=vmem, size = 0x9000, scoped, tag = 'internal scratch']
  %s0 = inlined_call_operand.vmem [shape: f32[8,2,8], index: 0, kind: input, shape index: {}]
  %s1 = inlined_call_operand.vmem [shape: f32[8,8,8], index: 1, kind: input, shape index: {}]
  %s2 = inlined_call_operand.vmem [shape: f32[8,2,8], index: 2, kind: output, shape index: {}]
  %s3 = sld [smem:[#allocation0]]
  $region18: #{spectral_conv1d.1} parent=0
    _
  %s5 = ssub.s32 1, %s3
  %s6 = scalar_select 0, %s5, %s3
  // Predicated region
  $region2: #{spectral_conv1d.1} parent=0 // pred_check
    _
  $region3: #{spectral_conv1d.1} parent=0 // pred_check_branch
    %8 = sbr.rel (0) target = $region5
  $region4: #{spectral_conv1d.1} parent=0 // pred_region
    _
  $region5: #{spectral_conv1d.1} parent=0 // pred_fallthru
    _
  // Predicated region
  $region6: #{spectral_conv1d.1} parent=0 // pred_check
    _
  $region7: #{spectral_conv1d.1} parent=0 // pred_check_branch
    %10 = sbr.rel (0) target = $region9
  $region8: #{spectral_conv1d.1} parent=0 // pred_region
    _
  $region9: #{spectral_conv1d.1} parent=0 // pred_fallthru
    _
  %v11 = vld [vmem:[%s0] sm:$0x3]
  %v12 = vld [vmem:[%s0 + $0x2] sm:$0x3]
  %v13 = vld [vmem:[%s0 + $0x4] sm:$0x3]
  %v14 = vld [vmem:[%s0 + $0x6] sm:$0x3]
  %v15 = vld [vmem:[%s0 + $0x8] sm:$0x3]
  %v16 = vld [vmem:[%s0 + $0xa] sm:$0x3]
  %v17 = vld [vmem:[%s0 + $0xc] sm:$0x3]
  %v18 = vld [vmem:[%s0 + $0xe] sm:$0x3]
  %v19 = vld [vmem:[%s1] sm:$0xff]
  %v20 = vld [vmem:[%s1 + $0x8] sm:$0xff]
  %v21 = vld [vmem:[%s1 + $0x10] sm:$0xff]
  %v22 = vld [vmem:[%s1 + $0x18] sm:$0xff]
  %v23 = vld [vmem:[%s1 + $0x20] sm:$0xff]
  %v24 = vld [vmem:[%s1 + $0x28] sm:$0xff]
  %v25 = vld [vmem:[%s1 + $0x30] sm:$0xff]
  %v26 = vld [vmem:[%s1 + $0x38] sm:$0xff]
  %28 = vset.pattern.permute.xlu0 0
  %29 = vperm.xlu0 %28, %v11
  %v30 = vpop.permute.xlu0 %29
  %33 = vset.pattern.permute.xlu0 0
  %34 = vperm.xlu0 %33, %v12
  %v35 = vpop.permute.xlu0 %34
  %38 = vset.pattern.permute.xlu0 0
  %39 = vperm.xlu0 %38, %v13
  %v40 = vpop.permute.xlu0 %39
  %43 = vset.pattern.permute.xlu0 0
  %44 = vperm.xlu0 %43, %v14
  %v45 = vpop.permute.xlu0 %44
  %48 = vset.pattern.permute.xlu0 0
  %49 = vperm.xlu0 %48, %v15
  %v50 = vpop.permute.xlu0 %49
  %53 = vset.pattern.permute.xlu0 0
  %54 = vperm.xlu0 %53, %v16
  %v55 = vpop.permute.xlu0 %54
  %58 = vset.pattern.permute.xlu0 0
  %59 = vperm.xlu0 %58, %v17
  %v60 = vpop.permute.xlu0 %59
  %63 = vset.pattern.permute.xlu0 0
  %64 = vperm.xlu0 %63, %v18
  %v65 = vpop.permute.xlu0 %64
  %v67 = vperm.slane %v19, 0
  %v68 = vperm.slane %v20, 0
  %v69 = vperm.slane %v21, 0
  %v70 = vperm.slane %v22, 0
  %v71 = vperm.slane %v23, 0
  %v72 = vperm.slane %v24, 0
  %v73 = vperm.slane %v25, 0
  %v74 = vperm.slane %v26, 0
  %v75 = vmul.f32 %v30, %v67
  %v76 = vmul.f32 %v35, %v68
  %v77 = vmul.f32 %v40, %v69
  %v78 = vmul.f32 %v45, %v70
  %v79 = vmul.f32 %v50, %v71
  %v80 = vmul.f32 %v55, %v72
  %v81 = vmul.f32 %v60, %v73
  %v82 = vmul.f32 %v65, %v74
  %v83 = vadd.f32 %v75, 0.0
  %v84 = vadd.f32 %v76, 0.0
  %v85 = vadd.f32 %v77, 0.0
  %v86 = vadd.f32 %v78, 0.0
  %v87 = vadd.f32 %v79, 0.0
  %v88 = vadd.f32 %v80, 0.0
  %v89 = vadd.f32 %v81, 0.0
  %v90 = vadd.f32 %v82, 0.0
  %91 = vset.pattern.permute.xlu0 1
  %92 = vperm.xlu0 %91, %v11
  %v93 = vpop.permute.xlu0 %92
  %95 = vset.pattern.permute.xlu0 1
  %96 = vperm.xlu0 %95, %v12
  %v97 = vpop.permute.xlu0 %96
  %99 = vset.pattern.permute.xlu0 1
  %100 = vperm.xlu0 %99, %v13
  %v101 = vpop.permute.xlu0 %100
  %103 = vset.pattern.permute.xlu0 1
  %104 = vperm.xlu0 %103, %v14
  %v105 = vpop.permute.xlu0 %104
  %107 = vset.pattern.permute.xlu0 1
  %108 = vperm.xlu0 %107, %v15
  %v109 = vpop.permute.xlu0 %108
  %111 = vset.pattern.permute.xlu0 1
  %112 = vperm.xlu0 %111, %v16
  %v113 = vpop.permute.xlu0 %112
  %115 = vset.pattern.permute.xlu0 1
  %116 = vperm.xlu0 %115, %v17
  %v117 = vpop.permute.xlu0 %116
  %119 = vset.pattern.permute.xlu0 1
  %120 = vperm.xlu0 %119, %v18
  %v121 = vpop.permute.xlu0 %120
  %v123 = vperm.slane %v19, 1
  %v124 = vperm.slane %v20, 1
  %v125 = vperm.slane %v21, 1
  %v126 = vperm.slane %v22, 1
  %v127 = vperm.slane %v23, 1
  %v128 = vperm.slane %v24, 1
  %v129 = vperm.slane %v25, 1
  %v130 = vperm.slane %v26, 1
  %v131 = vmul.f32 %v93, %v123
  %v132 = vmul.f32 %v97, %v124
  %v133 = vmul.f32 %v101, %v125
  %v134 = vmul.f32 %v105, %v126
  %v135 = vmul.f32 %v109, %v127
  %v136 = vmul.f32 %v113, %v128
  %v137 = vmul.f32 %v117, %v129
  %v138 = vmul.f32 %v121, %v130
  %v139 = vadd.f32 %v83, %v131
  %v140 = vadd.f32 %v84, %v132
  %v141 = vadd.f32 %v85, %v133
  %v142 = vadd.f32 %v86, %v134
  %v143 = vadd.f32 %v87, %v135
  %v144 = vadd.f32 %v88, %v136
  %v145 = vadd.f32 %v89, %v137
  %v146 = vadd.f32 %v90, %v138
  %147 = vset.pattern.permute.xlu0 2
  %148 = vperm.xlu0 %147, %v11
  %v149 = vpop.permute.xlu0 %148
  %151 = vset.pattern.permute.xlu0 2
  %152 = vperm.xlu0 %151, %v12
  %v153 = vpop.permute.xlu0 %152
  %155 = vset.pattern.permute.xlu0 2
  %156 = vperm.xlu0 %155, %v13
  %v157 = vpop.permute.xlu0 %156
  %159 = vset.pattern.permute.xlu0 2
  %160 = vperm.xlu0 %159, %v14
  %v161 = vpop.permute.xlu0 %160
  %163 = vset.pattern.permute.xlu0 2
  %164 = vperm.xlu0 %163, %v15
  %v165 = vpop.permute.xlu0 %164
  %167 = vset.pattern.permute.xlu0 2
  %168 = vperm.xlu0 %167, %v16
  %v169 = vpop.permute.xlu0 %168
  %171 = vset.pattern.permute.xlu0 2
  %172 = vperm.xlu0 %171, %v17
  %v173 = vpop.permute.xlu0 %172
  %175 = vset.pattern.permute.xlu0 2
  %176 = vperm.xlu0 %175, %v18
  %v177 = vpop.permute.xlu0 %176
  %v179 = vperm.slane %v19, 2
  %v180 = vperm.slane %v20, 2
  %v181 = vperm.slane %v21, 2
  %v182 = vperm.slane %v22, 2
  %v183 = vperm.slane %v23, 2
  %v184 = vperm.slane %v24, 2
  %v185 = vperm.slane %v25, 2
  %v186 = vperm.slane %v26, 2
  %v187 = vmul.f32 %v149, %v179
  %v188 = vmul.f32 %v153, %v180
  %v189 = vmul.f32 %v157, %v181
  %v190 = vmul.f32 %v161, %v182
  %v191 = vmul.f32 %v165, %v183
  %v192 = vmul.f32 %v169, %v184
  %v193 = vmul.f32 %v173, %v185
  %v194 = vmul.f32 %v177, %v186
  %v195 = vadd.f32 %v139, %v187
  %v196 = vadd.f32 %v140, %v188
  %v197 = vadd.f32 %v141, %v189
  %v198 = vadd.f32 %v142, %v190
  %v199 = vadd.f32 %v143, %v191
  %v200 = vadd.f32 %v144, %v192
  %v201 = vadd.f32 %v145, %v193
  %v202 = vadd.f32 %v146, %v194
  %203 = vset.pattern.permute.xlu0 3
  %204 = vperm.xlu0 %203, %v11
  %v205 = vpop.permute.xlu0 %204
  %207 = vset.pattern.permute.xlu0 3
  %208 = vperm.xlu0 %207, %v12
  %v209 = vpop.permute.xlu0 %208
  %211 = vset.pattern.permute.xlu0 3
  %212 = vperm.xlu0 %211, %v13
  %v213 = vpop.permute.xlu0 %212
  %215 = vset.pattern.permute.xlu0 3
  %216 = vperm.xlu0 %215, %v14
  %v217 = vpop.permute.xlu0 %216
  %219 = vset.pattern.permute.xlu0 3
  %220 = vperm.xlu0 %219, %v15
  %v221 = vpop.permute.xlu0 %220
  %223 = vset.pattern.permute.xlu0 3
  %224 = vperm.xlu0 %223, %v16
  %v225 = vpop.permute.xlu0 %224
  %227 = vset.pattern.permute.xlu0 3
  %228 = vperm.xlu0 %227, %v17
  %v229 = vpop.permute.xlu0 %228
  %231 = vset.pattern.permute.xlu0 3
  %232 = vperm.xlu0 %231, %v18
  %v233 = vpop.permute.xlu0 %232
  %v235 = vperm.slane %v19, 3
  %v236 = vperm.slane %v20, 3
  %v237 = vperm.slane %v21, 3
  %v238 = vperm.slane %v22, 3
  %v239 = vperm.slane %v23, 3
  %v240 = vperm.slane %v24, 3
  %v241 = vperm.slane %v25, 3
  %v242 = vperm.slane %v26, 3
  %v243 = vmul.f32 %v205, %v235
  %v244 = vmul.f32 %v209, %v236
  %v245 = vmul.f32 %v213, %v237
  %v246 = vmul.f32 %v217, %v238
  %v247 = vmul.f32 %v221, %v239
  %v248 = vmul.f32 %v225, %v240
  %v249 = vmul.f32 %v229, %v241
  %v250 = vmul.f32 %v233, %v242
  %v251 = vadd.f32 %v195, %v243
  %v252 = vadd.f32 %v196, %v244
  %v253 = vadd.f32 %v197, %v245
  %v254 = vadd.f32 %v198, %v246
  %v255 = vadd.f32 %v199, %v247
  %v256 = vadd.f32 %v200, %v248
  %v257 = vadd.f32 %v201, %v249
  %v258 = vadd.f32 %v202, %v250
  %259 = vset.pattern.permute.xlu0 4
  %260 = vperm.xlu0 %259, %v11
  %v261 = vpop.permute.xlu0 %260
  %263 = vset.pattern.permute.xlu0 4
  %264 = vperm.xlu0 %263, %v12
  %v265 = vpop.permute.xlu0 %264
  %267 = vset.pattern.permute.xlu0 4
  %268 = vperm.xlu0 %267, %v13
  %v269 = vpop.permute.xlu0 %268
  %271 = vset.pattern.permute.xlu0 4
  %272 = vperm.xlu0 %271, %v14
  %v273 = vpop.permute.xlu0 %272
  %275 = vset.pattern.permute.xlu0 4
  %276 = vperm.xlu0 %275, %v15
  %v277 = vpop.permute.xlu0 %276
  %279 = vset.pattern.permute.xlu0 4
  %280 = vperm.xlu0 %279, %v16
  %v281 = vpop.permute.xlu0 %280
  %283 = vset.pattern.permute.xlu0 4
  %284 = vperm.xlu0 %283, %v17
  %v285 = vpop.permute.xlu0 %284
  %287 = vset.pattern.permute.xlu0 4
  %288 = vperm.xlu0 %287, %v18
  %v289 = vpop.permute.xlu0 %288
  %v291 = vperm.slane %v19, 4
  %v292 = vperm.slane %v20, 4
  %v293 = vperm.slane %v21, 4
  %v294 = vperm.slane %v22, 4
  %v295 = vperm.slane %v23, 4
  %v296 = vperm.slane %v24, 4
  %v297 = vperm.slane %v25, 4
  %v298 = vperm.slane %v26, 4
  %v299 = vmul.f32 %v261, %v291
  %v300 = vmul.f32 %v265, %v292
  %v301 = vmul.f32 %v269, %v293
  %v302 = vmul.f32 %v273, %v294
  %v303 = vmul.f32 %v277, %v295
  %v304 = vmul.f32 %v281, %v296
  %v305 = vmul.f32 %v285, %v297
  %v306 = vmul.f32 %v289, %v298
  %v307 = vadd.f32 %v251, %v299
  %v308 = vadd.f32 %v252, %v300
  %v309 = vadd.f32 %v253, %v301
  %v310 = vadd.f32 %v254, %v302
  %v311 = vadd.f32 %v255, %v303
  %v312 = vadd.f32 %v256, %v304
  %v313 = vadd.f32 %v257, %v305
  %v314 = vadd.f32 %v258, %v306
  %315 = vset.pattern.permute.xlu0 5
  %316 = vperm.xlu0 %315, %v11
  %v317 = vpop.permute.xlu0 %316
  %319 = vset.pattern.permute.xlu0 5
  %320 = vperm.xlu0 %319, %v12
  %v321 = vpop.permute.xlu0 %320
  %323 = vset.pattern.permute.xlu0 5
  %324 = vperm.xlu0 %323, %v13
  %v325 = vpop.permute.xlu0 %324
  %327 = vset.pattern.permute.xlu0 5
  %328 = vperm.xlu0 %327, %v14
  %v329 = vpop.permute.xlu0 %328
  %331 = vset.pattern.permute.xlu0 5
  %332 = vperm.xlu0 %331, %v15
  %v333 = vpop.permute.xlu0 %332
  %335 = vset.pattern.permute.xlu0 5
  %336 = vperm.xlu0 %335, %v16
  %v337 = vpop.permute.xlu0 %336
  %339 = vset.pattern.permute.xlu0 5
  %340 = vperm.xlu0 %339, %v17
  %v341 = vpop.permute.xlu0 %340
  %343 = vset.pattern.permute.xlu0 5
  %344 = vperm.xlu0 %343, %v18
  %v345 = vpop.permute.xlu0 %344
  %v347 = vperm.slane %v19, 5
  %v348 = vperm.slane %v20, 5
  %v349 = vperm.slane %v21, 5
  %v350 = vperm.slane %v22, 5
  %v351 = vperm.slane %v23, 5
  %v352 = vperm.slane %v24, 5
  %v353 = vperm.slane %v25, 5
  %v354 = vperm.slane %v26, 5
  %v355 = vmul.f32 %v317, %v347
  %v356 = vmul.f32 %v321, %v348
  %v357 = vmul.f32 %v325, %v349
  %v358 = vmul.f32 %v329, %v350
  %v359 = vmul.f32 %v333, %v351
  %v360 = vmul.f32 %v337, %v352
  %v361 = vmul.f32 %v341, %v353
  %v362 = vmul.f32 %v345, %v354
  %v363 = vadd.f32 %v307, %v355
  %v364 = vadd.f32 %v308, %v356
  %v365 = vadd.f32 %v309, %v357
  %v366 = vadd.f32 %v310, %v358
  %v367 = vadd.f32 %v311, %v359
  %v368 = vadd.f32 %v312, %v360
  %v369 = vadd.f32 %v313, %v361
  %v370 = vadd.f32 %v314, %v362
  %371 = vset.pattern.permute.xlu0 6
  %372 = vperm.xlu0 %371, %v11
  %v373 = vpop.permute.xlu0 %372
  %375 = vset.pattern.permute.xlu0 6
  %376 = vperm.xlu0 %375, %v12
  %v377 = vpop.permute.xlu0 %376
  %379 = vset.pattern.permute.xlu0 6
  %380 = vperm.xlu0 %379, %v13
  %v381 = vpop.permute.xlu0 %380
  %383 = vset.pattern.permute.xlu0 6
  %384 = vperm.xlu0 %383, %v14
  %v385 = vpop.permute.xlu0 %384
  %387 = vset.pattern.permute.xlu0 6
  %388 = vperm.xlu0 %387, %v15
  %v389 = vpop.permute.xlu0 %388
  %391 = vset.pattern.permute.xlu0 6
  %392 = vperm.xlu0 %391, %v16
  %v393 = vpop.permute.xlu0 %392
  %395 = vset.pattern.permute.xlu0 6
  %396 = vperm.xlu0 %395, %v17
  %v397 = vpop.permute.xlu0 %396
  %399 = vset.pattern.permute.xlu0 6
  %400 = vperm.xlu0 %399, %v18
  %v401 = vpop.permute.xlu0 %400
  %v403 = vperm.slane %v19, 6
  %v404 = vperm.slane %v20, 6
  %v405 = vperm.slane %v21, 6
  %v406 = vperm.slane %v22, 6
  %v407 = vperm.slane %v23, 6
  %v408 = vperm.slane %v24, 6
  %v409 = vperm.slane %v25, 6
  %v410 = vperm.slane %v26, 6
  %v411 = vmul.f32 %v373, %v403
  %v412 = vmul.f32 %v377, %v404
  %v413 = vmul.f32 %v381, %v405
  %v414 = vmul.f32 %v385, %v406
  %v415 = vmul.f32 %v389, %v407
  %v416 = vmul.f32 %v393, %v408
  %v417 = vmul.f32 %v397, %v409
  %v418 = vmul.f32 %v401, %v410
  %v419 = vadd.f32 %v363, %v411
  %v420 = vadd.f32 %v364, %v412
  %v421 = vadd.f32 %v365, %v413
  %v422 = vadd.f32 %v366, %v414
  %v423 = vadd.f32 %v367, %v415
  %v424 = vadd.f32 %v368, %v416
  %v425 = vadd.f32 %v369, %v417
  %v426 = vadd.f32 %v370, %v418
  %427 = vset.pattern.permute.xlu0 7
  %428 = vperm.xlu0 %427, %v11
  %v429 = vpop.permute.xlu0 %428
  %431 = vset.pattern.permute.xlu0 7
  %432 = vperm.xlu0 %431, %v12
  %v433 = vpop.permute.xlu0 %432
  %435 = vset.pattern.permute.xlu0 7
  %436 = vperm.xlu0 %435, %v13
  %v437 = vpop.permute.xlu0 %436
  %439 = vset.pattern.permute.xlu0 7
  %440 = vperm.xlu0 %439, %v14
  %v441 = vpop.permute.xlu0 %440
  %443 = vset.pattern.permute.xlu0 7
  %444 = vperm.xlu0 %443, %v15
  %v445 = vpop.permute.xlu0 %444
  %447 = vset.pattern.permute.xlu0 7
  %448 = vperm.xlu0 %447, %v16
  %v449 = vpop.permute.xlu0 %448
  %451 = vset.pattern.permute.xlu0 7
  %452 = vperm.xlu0 %451, %v17
  %v453 = vpop.permute.xlu0 %452
  %455 = vset.pattern.permute.xlu0 7
  %456 = vperm.xlu0 %455, %v18
  %v457 = vpop.permute.xlu0 %456
  %v459 = vperm.slane %v19, 7
  %v460 = vperm.slane %v20, 7
  %v461 = vperm.slane %v21, 7
  %v462 = vperm.slane %v22, 7
  %v463 = vperm.slane %v23, 7
  %v464 = vperm.slane %v24, 7
  %v465 = vperm.slane %v25, 7
  %v466 = vperm.slane %v26, 7
  %v467 = vmul.f32 %v429, %v459
  %v468 = vmul.f32 %v433, %v460
  %v469 = vmul.f32 %v437, %v461
  %v470 = vmul.f32 %v441, %v462
  %v471 = vmul.f32 %v445, %v463
  %v472 = vmul.f32 %v449, %v464
  %v473 = vmul.f32 %v453, %v465
  %v474 = vmul.f32 %v457, %v466
  %v475 = vadd.f32 %v419, %v467
  %v476 = vadd.f32 %v420, %v468
  %v477 = vadd.f32 %v421, %v469
  %v478 = vadd.f32 %v422, %v470
  %v479 = vadd.f32 %v423, %v471
  %v480 = vadd.f32 %v424, %v472
  %v481 = vadd.f32 %v425, %v473
  %v482 = vadd.f32 %v426, %v474
  %vm483 = vcmask 58368
  %484 = vst.msk [vmem:[%s2] sm:$0x3] %vm483, %v475
  %485 = vst.msk [vmem:[%s2 + $0x2] sm:$0x3] %vm483, %v476
  %486 = vst.msk [vmem:[%s2 + $0x4] sm:$0x3] %vm483, %v477
  %487 = vst.msk [vmem:[%s2 + $0x6] sm:$0x3] %vm483, %v478
  %488 = vst.msk [vmem:[%s2 + $0x8] sm:$0x3] %vm483, %v479
  %489 = vst.msk [vmem:[%s2 + $0xa] sm:$0x3] %vm483, %v480
  %490 = vst.msk [vmem:[%s2 + $0xc] sm:$0x3] %vm483, %v481
  %491 = vst.msk [vmem:[%s2 + $0xe] sm:$0x3] %vm483, %v482
  // Predicated region
  $region10: #{spectral_conv1d.1} parent=0 // pred_check
    _
  $region11: #{spectral_conv1d.1} parent=0 // pred_check_branch
    %493 = sbr.rel (0) target = $region13
  $region12: #{spectral_conv1d.1} parent=0 // pred_region
    _
  $region13: #{spectral_conv1d.1} parent=0 // pred_fallthru
    _
  // Predicated region
  $region14: #{spectral_conv1d.1} parent=0 // pred_check
    _
  $region15: #{spectral_conv1d.1} parent=0 // pred_check_branch
    %495 = sbr.rel (0) target = $region17
  $region16: #{spectral_conv1d.1} parent=0 // pred_region
    _
  $region17: #{spectral_conv1d.1} parent=0 // pred_fallthru
    _

</llo_original>
